<compile_context>
chip_gen: v6e
topology: v6e:2x2x1
jax: 0.10.0
libtpu: 0.0.40
codegen_flags: <defaults>
</compile_context>

<pallas_src>
import jax
import jax.numpy as jnp
from jax.experimental import pallas as pl
from jax.experimental.pallas import tpu as pltpu

_LANE_CHOICES = (1024, 896, 768, 640, 512, 384, 256, 128)  # lane-dense widths
_TARGET_TILE_BYTES = 2 * 1024 * 1024                       # ~2 MiB per block
_SUBLANE_PACK = {4: 8, 2: 16, 1: 32}                       # itemsize -> sublanes


def _identity_kernel(x_ref, o_ref):
    # Element-wise hot path of the (abstract) block: pass-through.
    # Subclasses would replace this body with their conv/bn/act compute.
    o_ref[...] = x_ref[...]


def _pick_lanes(n: int) -> int:
    """Largest lane-dense width (multiple of 128) that divides n exactly."""
    for lanes in _LANE_CHOICES:
        if n % lanes == 0:
            return lanes
    return 128  # unreachable: callers pass n as a multiple of 128


def _run_identity_2d(x2d: jax.Array) -> jax.Array:
    """Tiled identity copy of a (rows, lanes) slab, lanes % 128 == 0."""
    rows, lanes = x2d.shape
    itemsize = jnp.dtype(x2d.dtype).itemsize
    pack = _SUBLANE_PACK.get(itemsize, 8)

    # Tile rows: ~2 MiB blocks, pack-aligned, and small enough that the grid
    # has at least 2 steps (lets "parallel" shard across v7x's 2 TensorCores).
    target_rows = max(pack, (_TARGET_TILE_BYTES // (lanes * itemsize)) // pack * pack)
    if rows <= pack:
        tile_rows = rows  # single whole-array block (full-dim blocks are legal)
    else:
        half = max(pack, (rows // 2) // pack * pack)
        tile_rows = max(pack, min(target_rows, half, (rows // pack) * pack))
    grid = (pl.cdiv(rows, tile_rows),)  # partial last block is masked by Pallas

    block_bytes = tile_rows * lanes * itemsize
    # 2 pipeline buffers x (in + out) blocks, plus headroom; stays well below
    # v5e's 16 MiB default scoped limit and v7x's 64 MiB physical VMEM.
    vmem_limit = min(max(4 * block_bytes + (1 << 20), 4 << 20), 32 << 20)

    return pl.pallas_call(
        _identity_kernel,
        out_shape=jax.ShapeDtypeStruct((rows, lanes), x2d.dtype),
        grid_spec=pltpu.PrefetchScalarGridSpec(
            num_scalar_prefetch=0,
            grid=grid,
            in_specs=[pl.BlockSpec((tile_rows, lanes), lambda i: (i, 0))],
            out_specs=pl.BlockSpec((tile_rows, lanes), lambda i: (i, 0)),
        ),
        compiler_params=pltpu.CompilerParams(
            dimension_semantics=("parallel",),
            vmem_limit_bytes=vmem_limit,
        ),
        cost_estimate=pl.CostEstimate(
            flops=0,
            transcendentals=0,
            bytes_accessed=2 * rows * lanes * itemsize,
        ),
    )(x2d)


def basic_block_forward(x: jax.Array) -> jax.Array:
    """Identity forward of the abstract BasicBlock via a tiled Pallas kernel.

    Common case (element count divisible by 128): zero extra HBM passes —
    the reshape to/from the 2-D lane-dense slab is a bitcast.  Otherwise the
    divisible bulk runs through the kernel and the tiny tail passes through.
    """
    orig_shape = x.shape
    total = x.size
    if total == 0:
        return x

    x_flat = x.reshape(-1)            # bitcast, no data movement
    rem = total % 128
    bulk = total - rem

    pieces = []
    if bulk:
        lanes = _pick_lanes(bulk)
        xb = x_flat if rem == 0 else x_flat[:bulk]
        y2d = _run_identity_2d(xb.reshape(bulk // lanes, lanes))
        pieces.append(y2d.reshape(-1))
    if rem:
        # TODO(synk): <128-element tail handled outside the kernel (identity);
        #             fold into the kernel once real compute exists.
        pieces.append(x_flat[bulk:])

    y_flat = pieces[0] if len(pieces) == 1 else jnp.concatenate(pieces)
    return y_flat.reshape(orig_shape)


if __name__ == "__main__":
    key = jax.random.PRNGKey(0)
    # Small NCHW input consistent with a conv-style block: batch=2, C=4, 16x16.
    x = jax.random.normal(key, (2, 4, 16, 16), dtype=jnp.float32)

    y = basic_block_forward(x)
    jax.block_until_ready(y)

    # Sanity check: abstract block's only defined data path is identity.
    assert y.shape == x.shape and y.dtype == x.dtype
    assert bool(jnp.allclose(y, x))

    print("KERNEL_OK")
</pallas_src>

<mosaic_0001>
module attributes {stable_mosaic.version = 11 : i64} {
  func.func @_identity_kernel(%arg0: i32, %arg1: memref<2x1024xf32, #tpu.memory_space<vmem>>, %arg2: memref<2x1024xf32, #tpu.memory_space<vmem>>) attributes {dimension_semantics = [#tpu.dimension_semantics<parallel>], iteration_bounds = array<i64: 1>, scalar_prefetch = 0 : i64, scratch_operands = 0 : i64, tpu.core_type = #tpu.core_type<tc>, window_params = [{transform_indices = @transform_0, window_bounds = array<i64: 2, 1024>}, {transform_indices = @transform_1, window_bounds = array<i64: 2, 1024>}]} {
    %c0 = arith.constant 0 : index
    %c0_0 = arith.constant 0 : index
    %0 = vector.load %arg1[%c0, %c0_0] : memref<2x1024xf32, #tpu.memory_space<vmem>>, vector<2x1024xf32>
    %c0_1 = arith.constant 0 : index
    %c0_2 = arith.constant 0 : index
    %1 = vector.load %arg2[%c0_1, %c0_2] : memref<2x1024xf32, #tpu.memory_space<vmem>>, vector<2x1024xf32>
    tpu.vector_store %arg2[%c0_1, %c0_2], %0 {strides = array<i32>} : memref<2x1024xf32, #tpu.memory_space<vmem>>, vector<2x1024xf32>,
    return
  }
  func.func @transform_0(%arg0: i32) -> (i32, i32) {
    %c0_i32 = arith.constant 0 : i32
    %c0_i32_0 = arith.constant 0 : i32
    return %arg0, %c0_i32 : i32, i32
  }
  func.func @transform_1(%arg0: i32) -> (i32, i32) {
    %c0_i32 = arith.constant 0 : i32
    %c0_i32_0 = arith.constant 0 : i32
    return %arg0, %c0_i32 : i32, i32
  }
}

</mosaic_0001>

<llo_original>
// kernel: tpu_custom_call.1
$region0: #{tpu_custom_call.1}
  #allocation0 [shape = 'u32[]', space=smem, size = 0x4, offset = 0x4, fixed_abs, tag = 'smem constant byte address 0x4 - core index']
  #allocation1 [shape = 'u32[144,128]{1,0:T(1,128)}', space=vmem, size = 0x12000, scoped, tag = 'internal scratch']
  %s0 = inlined_call_operand.hbm [shape: f32[2,1024], index: 0, kind: input, shape index: {}]
  %s1 = inlined_call_operand.hbm [shape: f32[2,1024], index: 1, kind: output, shape index: {}]
  %s2 = sld [smem:[#allocation0]]
  $region18: #{tpu_custom_call.1} parent=0
    _
  %s4 = ssub.s32 1, %s2
  %s5 = scalar_select 0, %s4, %s2
  $region1: #{tpu_custom_call.1} parent=0
    #allocation2 [shape = 'u8[8192]{0}', space=vmem, size = 0x2000, scoped, tag = 'input window, operand 0, single buffered']
    #allocation3 [shape = 's32[1]{0}', space=sflag, size = 0x4, scoped, tag = 'scoped memory for tpu_custom_call.1']
    #allocation4 [shape = 's32[1]{0}', space=sflag, size = 0x4, scoped, tag = 'scoped memory for tpu_custom_call.1']
    #allocation5 [shape = 'u8[8192]{0}', space=vmem, size = 0x2000, scoped, tag = 'output window, operand 0, single buffered']
    %6 = vsyncpa [#allocation3], 0
    %7 = vsyncpa [#allocation4], 0
    // Predicated region
    $region2: #{tpu_custom_call.1} parent=1 // pred_check
      _
    $region3: #{tpu_custom_call.1} parent=1 // pred_check_branch
      %9 = sbr.rel (0) target = $region5
    $region4: #{tpu_custom_call.1} parent=1 // pred_region
      %s11 = ssub.s32 256, 256
      %12 = vsyncadd [#allocation3], %s11
      %s14 = sshll.u32 [#allocation2], 4
      %s15 = int_to_ptr.vmem [resolvable:$true] %s14
      %17 = dma.hbm_to_vmem [thread:$0]  %s0, 256, %s15, [#allocation3]
    $region5: #{tpu_custom_call.1} parent=1 // pred_fallthru
      _
    // Predicated region
    $region6: #{tpu_custom_call.1} parent=1 // pred_check
      _
    $region7: #{tpu_custom_call.1} parent=1 // pred_check_branch
      %19 = sbr.rel (0) target = $region9
    $region8: #{tpu_custom_call.1} parent=1 // pred_region
      %20 = dma.done [#allocation3], 256
    $region9: #{tpu_custom_call.1} parent=1 // pred_fallthru
      _
    %v21 = vld [vmem:[#allocation2] sm:$0xff]
    %v22 = vld [vmem:[#allocation2 + $0x8] sm:$0xff]
    %23 = vst [vmem:[#allocation5] sm:$0xff] %v21
    %24 = vst [vmem:[#allocation5 + $0x8] sm:$0xff] %v22
    // Predicated region
    $region10: #{tpu_custom_call.1} parent=1 // pred_check
      _
    $region11: #{tpu_custom_call.1} parent=1 // pred_check_branch
      %26 = sbr.rel (0) target = $region13
    $region12: #{tpu_custom_call.1} parent=1 // pred_region
      %s28 = ssub.s32 256, 256
      %29 = vsyncadd [#allocation4], %s28
      %s31 = sshll.u32 [#allocation5], 4
      %s32 = int_to_ptr.vmem [resolvable:$true] %s31
      %34 = dma.vmem_to_hbm [thread:$0]  %s32, 256, %s1, [#allocation4]
    $region13: #{tpu_custom_call.1} parent=1 // pred_fallthru
      _
    // Predicated region
    $region14: #{tpu_custom_call.1} parent=1 // pred_check
      _
    $region15: #{tpu_custom_call.1} parent=1 // pred_check_branch
      %36 = sbr.rel (0) target = $region17
    $region16: #{tpu_custom_call.1} parent=1 // pred_region
      %37 = dma.done [#allocation4], 256
    $region17: #{tpu_custom_call.1} parent=1 // pred_fallthru
      _
    %38 = vsyncpa [#allocation3], 1
    %39 = vsyncpa [#allocation4], 1

</llo_original>
